<compile_context>
chip_gen: v7x
topology: tpu7x:2x2x1
jax: 0.10.0
libtpu: 0.0.40
codegen_flags: <defaults>
</compile_context>

<pallas_src>
import math

import jax
import jax.numpy as jnp
from jax.experimental import pallas as pl
from jax.experimental.pallas import tpu as pltpu


def _round_up(x, m):
    return (x + m - 1) // m * m


def _is_pow2(v):
    return v > 0 and (v & (v - 1)) == 0


def _vmem_capacity_bytes():
    """Per-core VMEM capacity; conservative 64 MiB (v7x-sized) fallback."""
    try:
        info = pltpu.get_tpu_info()
        for name in ("vmem_capacity_bytes", "vmem_bytes", "vmem_size_bytes"):
            cap = getattr(info, name, None)
            if cap:
                return int(cap)
    except Exception:
        pass
    return 64 << 20


def _invariant_spec(block_shape, index_map):
    """BlockSpec for a grid-invariant operand.

    Single-buffer it (pipeline_mode=pl.Buffered(1)) so the pipeline does not
    provision a useless second buffer; fall back to a plain BlockSpec if this
    JAX build rejects the kwarg.
    """
    try:
        return pl.BlockSpec(block_shape, index_map, pipeline_mode=pl.Buffered(1))
    except Exception:
        return pl.BlockSpec(block_shape, index_map)


# ----------------------------- kernels --------------------------------------


def _make_layer1_kernel(agg_dtype):
    """Fused layer-1 'add' aggregation + ReLU + layer-2 projection, K-tiled.

    agg_dtype is the dtype fed to the aggregation/projection MXU matmuls:
      * jnp.float32  -> exact parity with an f32 reference (bf16 A is promoted
                        inside jnp.dot; f32 matmuls cost extra MXU passes).
      * jnp.bfloat16 -> pure bf16 x bf16 single-pass MXU matmuls with f32
                        accumulation (slight precision loss).
    """

    def kernel(a_ref, x_ref, w1_ref, w2_ref, p2_ref, acc_ref):
        k = pl.program_id(1)

        @pl.when(k == 0)
        def _init():
            acc_ref[...] = jnp.zeros_like(acc_ref)

        # Project this K slice of node features: (tk, nfeat) @ (nfeat, nhid_pad).
        # nfeat is small, so recomputing per row tile is cheaper than a P1
        # HBM round trip.
        p1 = jnp.dot(x_ref[...], w1_ref[...],
                     preferred_element_type=jnp.float32)

        # Layer-1 'add' aggregation for this K slice; f32 accumulation.
        # a_ref stays bf16; jnp.dot promotes it only when p1 is f32.
        acc_ref[...] += jnp.dot(a_ref[...], p1.astype(agg_dtype),
                                preferred_element_type=jnp.float32)

        @pl.when(k == pl.num_programs(1) - 1)
        def _finalize():
            h = jnp.maximum(acc_ref[...], 0.0)          # ReLU (layer-1 output)
            p2_ref[...] = jnp.dot(h.astype(agg_dtype), w2_ref[...],
                                  preferred_element_type=jnp.float32,
                                  ).astype(p2_ref.dtype)

    return kernel


def _layer2_kernel(a_ref, p2_ref, out_ref, acc_ref):
    """Layer-2 'add' aggregation: out[i] = sum_k A[i, k] @ P2[k], K-tiled."""
    k = pl.program_id(1)

    @pl.when(k == 0)
    def _init():
        acc_ref[...] = jnp.zeros_like(acc_ref)

    acc_ref[...] += jnp.dot(a_ref[...], p2_ref[...],
                            preferred_element_type=jnp.float32)

    @pl.when(k == pl.num_programs(1) - 1)
    def _finalize():
        out_ref[...] = acc_ref[...].astype(out_ref.dtype)


# ----------------------------- wrapper ---------------------------------------


def net2_pallas(adj_bf16, x, w1, w2, *, row_tile=None, k_tile=None,
                use_bf16_intermediates=False):
    """out = A @ ( relu(A @ (x @ W1)) @ W2 )   (A[i, j] = #edges j -> i)."""
    n, nfeat = x.shape
    nhid = w1.shape[1]
    nclass = w2.shape[1]
    assert adj_bf16.shape == (n, n)
    assert w1.shape == (nfeat, nhid)
    assert w2.shape == (nhid, nclass)

    nhid_pad = _round_up(nhid, 128)    # lane-dense accumulator / intermediates
    ncls_pad = _round_up(nclass, 128)  # lane-dense output stores

    inter_dtype = jnp.bfloat16 if use_bf16_intermediates else jnp.float32
    p_sz = jnp.dtype(inter_dtype).itemsize

    # ---- per-generation VMEM budget & default tiles --------------------------
    vmem_cap = _vmem_capacity_bytes()
    big_vmem = vmem_cap >= (100 << 20)                 # v5e / v6e (128 MiB)
    vmem_budget = int(min(vmem_cap * 3 // 4, 100 << 20))  # ~48 MiB v7x, ~96 MiB v5e/v6e
    if row_tile is None:
        row_tile = 1024 if big_vmem else 512
    if k_tile is None:
        k_tile = 1024 if big_vmem else 512

    n8 = _round_up(n, 8)
    tm = min(row_tile, n8)
    tk = min(k_tile, n8)

    def _pass_bytes(tm_, tk_):
        """Worst-case VMEM per grid step over both passes, incl. in-kernel temps."""
        a_tile = 2 * tm_ * tk_ * 2                                # bf16 A, 2 bufs
        a_up = 0 if use_bf16_intermediates else tm_ * tk_ * 4     # f32 promote temp
        pass_a = (a_tile + a_up
                  + 2 * tk_ * nfeat * 4                           # x K tile, 2 bufs
                  + nfeat * nhid_pad * 4                          # W1 (1 buf)
                  + nhid_pad * ncls_pad * p_sz                    # W2 (1 buf)
                  + 2 * tm_ * ncls_pad * p_sz                     # P2 out tile
                  + tm_ * nhid_pad * 4                            # f32 accumulator
                  + 2 * tk_ * nhid_pad * 4                        # p1 temp (+cast)
                  + tm_ * nhid_pad * 4)                           # relu temp
        pass_b = (a_tile + a_up
                  + 2 * tk_ * ncls_pad * p_sz                     # P2 K tile
                  + (0 if use_bf16_intermediates else tk_ * ncls_pad * 4)
                  + 2 * tm_ * ncls_pad * 4                        # out tile
                  + tm_ * ncls_pad * 4)                           # f32 accumulator
        return max(pass_a, pass_b)

    # Shrink (power-of-two) tiles until they fit, leaving Mosaic scratch headroom.
    headroom = 8 << 20
    while _is_pow2(tk) and tk > 256 and _pass_bytes(tm, tk) > vmem_budget - headroom:
        tk //= 2
    while _is_pow2(tm) and tm > 256 and _pass_bytes(tm, tk) > vmem_budget - headroom:
        tm //= 2

    n_pad = _round_up(n8, max(tm, tk))
    grid = (n_pad // tm, n_pad // tk)
    # Rows shard across cores (megacore on v7x); K is the reduction -> last + arbitrary.
    cparams = pltpu.CompilerParams(
        dimension_semantics=("parallel", "arbitrary"),
        vmem_limit_bytes=vmem_budget,
    )

    # ---- pad inputs (skip the O(N^2) adjacency pad when already aligned) -----
    a_p = adj_bf16.astype(jnp.bfloat16)
    if n_pad != n:
        a_p = jnp.pad(a_p, ((0, n_pad - n), (0, n_pad - n)))
    x_p = x.astype(jnp.float32)
    if n_pad != n:
        x_p = jnp.pad(x_p, ((0, n_pad - n), (0, 0)))
    w1_p = jnp.pad(w1.astype(jnp.float32), ((0, 0), (0, nhid_pad - nhid)))
    w2_p = jnp.pad(
        w2.astype(jnp.float32), ((0, nhid_pad - nhid), (0, ncls_pad - nclass))
    ).astype(inter_dtype)

    # ---- pass A: P2 = relu(A @ (x @ W1)) @ W2pad ------------------------------
    p2 = pl.pallas_call(
        _make_layer1_kernel(inter_dtype),
        out_shape=jax.ShapeDtypeStruct((n_pad, ncls_pad), inter_dtype),
        grid=grid,
        in_specs=[
            pl.BlockSpec((tm, tk), lambda i, k: (i, k)),               # A tile
            pl.BlockSpec((tk, nfeat), lambda i, k: (k, 0)),            # x K tile
            _invariant_spec((nfeat, nhid_pad), lambda i, k: (0, 0)),   # W1
            _invariant_spec((nhid_pad, ncls_pad), lambda i, k: (0, 0)),  # W2pad
        ],
        out_specs=pl.BlockSpec((tm, ncls_pad), lambda i, k: (i, 0)),
        scratch_shapes=[pltpu.VMEM((tm, nhid_pad), jnp.float32)],
        compiler_params=cparams,
    )(a_p, x_p, w1_p, w2_p)

    # ---- pass B: out = A @ P2 -------------------------------------------------
    out_pad = pl.pallas_call(
        _layer2_kernel,
        out_shape=jax.ShapeDtypeStruct((n_pad, ncls_pad), jnp.float32),
        grid=grid,
        in_specs=[
            pl.BlockSpec((tm, tk), lambda i, k: (i, k)),               # A tile
            pl.BlockSpec((tk, ncls_pad), lambda i, k: (k, 0)),         # P2 K tile
        ],
        out_specs=pl.BlockSpec((tm, ncls_pad), lambda i, k: (i, 0)),
        scratch_shapes=[pltpu.VMEM((tm, ncls_pad), jnp.float32)],
        compiler_params=cparams,
    )(a_p, p2)

    return out_pad[:n, :nclass]


# ----------------------------- glue / reference -------------------------------


def build_dense_adjacency(edge_index, num_nodes):
    """A[i, j] = number of edges j -> i (PyG default source_to_target flow).

    Note: bf16 storage of A is exact only for edge multiplicities <= 256.
    """
    src, dst = edge_index[0], edge_index[1]
    a = jnp.zeros((num_nodes, num_nodes), dtype=jnp.float32)
    return a.at[dst, src].add(1.0)


def net2_reference(adj, x, w1, w2):
    h = jnp.maximum(adj @ (x @ w1), 0.0)
    return adj @ (h @ w2)


if __name__ == "__main__":
    # Small, deterministic problem sizes.
    num_nodes = 16
    nfeat, nhid, nclass = 8, 32, 4
    num_edges = 48

    key = jax.random.PRNGKey(0)
    kx, ke1, ke2, kw1, kw2 = jax.random.split(key, 5)

    # Node features.
    x = jax.random.normal(kx, (num_nodes, nfeat), dtype=jnp.float32)

    # Random directed edges (2, E): row 0 = source, row 1 = target.
    src = jax.random.randint(ke1, (num_edges,), 0, num_nodes)
    dst = jax.random.randint(ke2, (num_edges,), 0, num_nodes)
    edge_index = jnp.stack([src, dst], axis=0)
    adj_f32 = build_dense_adjacency(edge_index, num_nodes)
    assert float(adj_f32.max()) <= 256.0   # bf16 stores these counts exactly
    adj_bf16 = adj_f32.astype(jnp.bfloat16)

    # GCNConv weight init: uniform(-stdv, stdv), stdv = 1/sqrt(out_channels).
    stdv1 = 1.0 / math.sqrt(nhid)
    w1 = jax.random.uniform(
        kw1, (nfeat, nhid), minval=-stdv1, maxval=stdv1, dtype=jnp.float32
    )
    stdv2 = 1.0 / math.sqrt(nclass)
    w2 = jax.random.uniform(
        kw2, (nhid, nclass), minval=-stdv2, maxval=stdv2, dtype=jnp.float32
    )

    ref = net2_reference(adj_f32, x, w1, w2)

    # Exact-parity path (f32 intermediates / f32 MXU).
    net2_f32 = jax.jit(net2_pallas)
    out = jax.block_until_ready(net2_f32(adj_bf16, x, w1, w2))
    assert out.shape == (num_nodes, nclass)
    assert jnp.allclose(out, ref, atol=1e-4, rtol=1e-4)

    # Fast path (pure bf16 MXU operands, f32 accumulation) -- looser tolerance.
    net2_fast = jax.jit(
        lambda a, xx, a1, a2: net2_pallas(a, xx, a1, a2, use_bf16_intermediates=True)
    )
    out_fast = jax.block_until_ready(net2_fast(adj_bf16, x, w1, w2))
    assert out_fast.shape == (num_nodes, nclass)
    assert jnp.allclose(out_fast, ref, atol=1e-1, rtol=1e-1)

    print("KERNEL_OK")
</pallas_src>

<mosaic_0001>
module attributes {stable_mosaic.version = 11 : i64} {
  func.func @_layer2_kernel(%arg0: i32, %arg1: i32, %arg2: memref<16x16xbf16, #tpu.memory_space<vmem>>, %arg3: memref<16x128xf32, #tpu.memory_space<vmem>>, %arg4: memref<16x128xf32, #tpu.memory_space<vmem>>, %arg5: memref<16x128xf32, #tpu.memory_space<vmem>>) attributes {dimension_semantics = [#tpu.dimension_semantics<parallel>, #tpu.dimension_semantics<arbitrary>], iteration_bounds = array<i64: 1, 1>, scalar_prefetch = 0 : i64, scratch_operands = 1 : i64, tpu.core_type = #tpu.core_type<tc>, window_params = [{transform_indices = @transform_0, window_bounds = array<i64: 16, 16>}, {transform_indices = @transform_1, window_bounds = array<i64: 16, 128>}, {transform_indices = @transform_2, window_bounds = array<i64: 16, 128>}]} {
    %c0_i32 = arith.constant 0 : i32
    %0 = arith.cmpi eq, %arg1, %c0_i32 : i32
    %1 = arith.extui %0 : i1 to i32
    %c0_i32_0 = arith.constant 0 : i32
    %2 = arith.cmpi ne, %1, %c0_i32_0 : i32
    scf.if %2 {
      %cst_10 = arith.constant 0.000000e+00 : f32
      %12 = vector.broadcast %cst_10 : f32 to vector<16x128xf32>
      %c0_11 = arith.constant 0 : index
      %c0_12 = arith.constant 0 : index
      %13 = vector.load %arg5[%c0_11, %c0_12] : memref<16x128xf32, #tpu.memory_space<vmem>>, vector<16x128xf32>
      tpu.vector_store %arg5[%c0_11, %c0_12], %12 {strides = array<i32>} : memref<16x128xf32, #tpu.memory_space<vmem>>, vector<16x128xf32>,
    } else {
    }
    %c0 = arith.constant 0 : index
    %c0_1 = arith.constant 0 : index
    %3 = vector.load %arg5[%c0, %c0_1] : memref<16x128xf32, #tpu.memory_space<vmem>>, vector<16x128xf32>
    %c0_2 = arith.constant 0 : index
    %c0_3 = arith.constant 0 : index
    %4 = vector.load %arg2[%c0_2, %c0_3] : memref<16x16xbf16, #tpu.memory_space<vmem>>, vector<16x16xbf16>
    %c0_4 = arith.constant 0 : index
    %c0_5 = arith.constant 0 : index
    %5 = vector.load %arg3[%c0_4, %c0_5] : memref<16x128xf32, #tpu.memory_space<vmem>>, vector<16x128xf32>
    %cst = arith.constant dense<0.000000e+00> : vector<16x128xf32>
    %6 = tpu.matmul %4, %5, %cst {dimension_numbers = #tpu.dot_dimension_numbers<[1], [0], [0], [1], [0, 0, 1, 1], [], []>} : vector<16x16xbf16>, vector<16x128xf32>, vector<16x128xf32> -> vector<16x128xf32>
    %7 = arith.addf %3, %6 : vector<16x128xf32>
    %c0_6 = arith.constant 0 : index
    %c0_7 = arith.constant 0 : index
    %8 = vector.load %arg5[%c0_6, %c0_7] : memref<16x128xf32, #tpu.memory_space<vmem>>, vector<16x128xf32>
    tpu.vector_store %arg5[%c0_6, %c0_7], %7 {strides = array<i32>} : memref<16x128xf32, #tpu.memory_space<vmem>>, vector<16x128xf32>,
    %c0_i32_8 = arith.constant 0 : i32
    %9 = arith.cmpi eq, %arg1, %c0_i32_8 : i32
    %10 = arith.extui %9 : i1 to i32
    %c0_i32_9 = arith.constant 0 : i32
    %11 = arith.cmpi ne, %10, %c0_i32_9 : i32
    scf.if %11 {
      %c0_10 = arith.constant 0 : index
      %c0_11 = arith.constant 0 : index
      %12 = vector.load %arg5[%c0_10, %c0_11] : memref<16x128xf32, #tpu.memory_space<vmem>>, vector<16x128xf32>
      %c0_12 = arith.constant 0 : index
      %c0_13 = arith.constant 0 : index
      %13 = vector.load %arg4[%c0_12, %c0_13] : memref<16x128xf32, #tpu.memory_space<vmem>>, vector<16x128xf32>
      tpu.vector_store %arg4[%c0_12, %c0_13], %12 {strides = array<i32>} : memref<16x128xf32, #tpu.memory_space<vmem>>, vector<16x128xf32>,
    } else {
    }
    return
  }
  func.func @transform_0(%arg0: i32, %arg1: i32) -> (i32, i32) {
    %c0_i32 = arith.constant 0 : i32
    return %arg0, %arg1 : i32, i32
  }
  func.func @transform_1(%arg0: i32, %arg1: i32) -> (i32, i32) {
    %c0_i32 = arith.constant 0 : i32
    %c0_i32_0 = arith.constant 0 : i32
    return %arg1, %c0_i32 : i32, i32
  }
  func.func @transform_2(%arg0: i32, %arg1: i32) -> (i32, i32) {
    %c0_i32 = arith.constant 0 : i32
    %c0_i32_0 = arith.constant 0 : i32
    return %arg0, %c0_i32 : i32, i32
  }
}

module attributes {stable_mosaic.version = 11 : i64} {
  func.func @kernel(%arg0: i32, %arg1: i32, %arg2: memref<16x16xbf16, #tpu.memory_space<vmem>>, %arg3: memref<16x8xf32, #tpu.memory_space<vmem>>, %arg4: memref<8x128xf32, #tpu.memory_space<vmem>>, %arg5: memref<128x128xf32, #tpu.memory_space<vmem>>, %arg6: memref<16x128xf32, #tpu.memory_space<vmem>>, %arg7: memref<16x128xf32, #tpu.memory_space<vmem>>) attributes {dimension_semantics = [#tpu.dimension_semantics<parallel>, #tpu.dimension_semantics<arbitrary>], iteration_bounds = array<i64: 1, 1>, scalar_prefetch = 0 : i64, scratch_operands = 1 : i64, tpu.core_type = #tpu.core_type<tc>, window_params = [{transform_indices = @transform_0, window_bounds = array<i64: 16, 16>}, {transform_indices = @transform_1, window_bounds = array<i64: 16, 8>}, {pipeline_mode = #tpu.pipeline_mode<synchronous>, transform_indices = @transform_2, window_bounds = array<i64: 8, 128>}, {pipeline_mode = #tpu.pipeline_mode<synchronous>, transform_indices = @transform_3, window_bounds = array<i64: 128, 128>}, {transform_indices = @transform_4, window_bounds = array<i64: 16, 128>}]} {
    %c0_i32 = arith.constant 0 : i32
    %0 = arith.cmpi eq, %arg1, %c0_i32 : i32
    %1 = arith.extui %0 : i1 to i32
    %c0_i32_0 = arith.constant 0 : i32
    %2 = arith.cmpi ne, %1, %c0_i32_0 : i32
    scf.if %2 {
      %cst_13 = arith.constant 0.000000e+00 : f32
      %14 = vector.broadcast %cst_13 : f32 to vector<16x128xf32>
      %c0_14 = arith.constant 0 : index
      %c0_15 = arith.constant 0 : index
      %15 = vector.load %arg7[%c0_14, %c0_15] : memref<16x128xf32, #tpu.memory_space<vmem>>, vector<16x128xf32>
      tpu.vector_store %arg7[%c0_14, %c0_15], %14 {strides = array<i32>} : memref<16x128xf32, #tpu.memory_space<vmem>>, vector<16x128xf32>,
    } else {
    }
    %c0 = arith.constant 0 : index
    %c0_1 = arith.constant 0 : index
    %3 = vector.load %arg3[%c0, %c0_1] : memref<16x8xf32, #tpu.memory_space<vmem>>, vector<16x8xf32>
    %c0_2 = arith.constant 0 : index
    %c0_3 = arith.constant 0 : index
    %4 = vector.load %arg4[%c0_2, %c0_3] : memref<8x128xf32, #tpu.memory_space<vmem>>, vector<8x128xf32>
    %cst = arith.constant dense<0.000000e+00> : vector<16x128xf32>
    %5 = tpu.matmul %3, %4, %cst {dimension_numbers = #tpu.dot_dimension_numbers<[1], [0], [0], [1], [0, 0, 1, 1], [], []>} : vector<16x8xf32>, vector<8x128xf32>, vector<16x128xf32> -> vector<16x128xf32>
    %c0_4 = arith.constant 0 : index
    %c0_5 = arith.constant 0 : index
    %6 = vector.load %arg7[%c0_4, %c0_5] : memref<16x128xf32, #tpu.memory_space<vmem>>, vector<16x128xf32>
    %c0_6 = arith.constant 0 : index
    %c0_7 = arith.constant 0 : index
    %7 = vector.load %arg2[%c0_6, %c0_7] : memref<16x16xbf16, #tpu.memory_space<vmem>>, vector<16x16xbf16>
    %cst_8 = arith.constant dense<0.000000e+00> : vector<16x128xf32>
    %8 = tpu.matmul %7, %5, %cst_8 {dimension_numbers = #tpu.dot_dimension_numbers<[1], [0], [0], [1], [0, 0, 1, 1], [], []>} : vector<16x16xbf16>, vector<16x128xf32>, vector<16x128xf32> -> vector<16x128xf32>
    %9 = arith.addf %6, %8 : vector<16x128xf32>
    %c0_9 = arith.constant 0 : index
    %c0_10 = arith.constant 0 : index
    %10 = vector.load %arg7[%c0_9, %c0_10] : memref<16x128xf32, #tpu.memory_space<vmem>>, vector<16x128xf32>
    tpu.vector_store %arg7[%c0_9, %c0_10], %9 {strides = array<i32>} : memref<16x128xf32, #tpu.memory_space<vmem>>, vector<16x128xf32>,
    %c0_i32_11 = arith.constant 0 : i32
    %11 = arith.cmpi eq, %arg1, %c0_i32_11 : i32
    %12 = arith.extui %11 : i1 to i32
    %c0_i32_12 = arith.constant 0 : i32
    %13 = arith.cmpi ne, %12, %c0_i32_12 : i32
    scf.if %13 {
      %c0_13 = arith.constant 0 : index
      %c0_14 = arith.constant 0 : index
      %14 = vector.load %arg7[%c0_13, %c0_14] : memref<16x128xf32, #tpu.memory_space<vmem>>, vector<16x128xf32>
      %cst_15 = arith.constant 0.000000e+00 : f32
      %15 = vector.broadcast %cst_15 : f32 to vector<16x128xf32>
      %16 = arith.maximumf %14, %15 : vector<16x128xf32>
      %c0_16 = arith.constant 0 : index
      %c0_17 = arith.constant 0 : index
      %17 = vector.load %arg5[%c0_16, %c0_17] : memref<128x128xf32, #tpu.memory_space<vmem>>, vector<128x128xf32>
      %cst_18 = arith.constant dense<0.000000e+00> : vector<16x128xf32>
      %18 = tpu.matmul %16, %17, %cst_18 {dimension_numbers = #tpu.dot_dimension_numbers<[1], [0], [0], [1], [0, 0, 1, 1], [], []>} : vector<16x128xf32>, vector<128x128xf32>, vector<16x128xf32> -> vector<16x128xf32>
      %c0_19 = arith.constant 0 : index
      %c0_20 = arith.constant 0 : index
      %19 = vector.load %arg6[%c0_19, %c0_20] : memref<16x128xf32, #tpu.memory_space<vmem>>, vector<16x128xf32>
      tpu.vector_store %arg6[%c0_19, %c0_20], %18 {strides = array<i32>} : memref<16x128xf32, #tpu.memory_space<vmem>>, vector<16x128xf32>,
    } else {
    }
    return
  }
  func.func @transform_0(%arg0: i32, %arg1: i32) -> (i32, i32) {
    %c0_i32 = arith.constant 0 : i32
    return %arg0, %arg1 : i32, i32
  }
  func.func @transform_1(%arg0: i32, %arg1: i32) -> (i32, i32) {
    %c0_i32 = arith.constant 0 : i32
    %c0_i32_0 = arith.constant 0 : i32
    return %arg1, %c0_i32 : i32, i32
  }
  func.func @transform_2(%arg0: i32, %arg1: i32) -> (i32, i32) {
    %c0_i32 = arith.constant 0 : i32
    %c0_i32_0 = arith.constant 0 : i32
    %c0_i32_1 = arith.constant 0 : i32
    return %c0_i32, %c0_i32_0 : i32, i32
  }
  func.func @transform_3(%arg0: i32, %arg1: i32) -> (i32, i32) {
    %c0_i32 = arith.constant 0 : i32
    %c0_i32_0 = arith.constant 0 : i32
    %c0_i32_1 = arith.constant 0 : i32
    return %c0_i32, %c0_i32_0 : i32, i32
  }
  func.func @transform_4(%arg0: i32, %arg1: i32) -> (i32, i32) {
    %c0_i32 = arith.constant 0 : i32
    %c0_i32_0 = arith.constant 0 : i32
    return %arg0, %c0_i32 : i32, i32
  }
}

</mosaic_0001>

<llo_original>
// kernel: net2_pallas.3
$region0: #{net2_pallas.3}
  #allocation0 [shape = 'u32[]', space=smem, size = 0x4, offset = 0x4, fixed_abs, tag = 'smem constant byte address 0x4 - core index']
  #allocation1 [shape = 'u32[144,128]{1,0:T(1,128)}', space=vmem, size = 0x12000, scoped, tag = 'internal scratch']
  #allocation2 [shape = 'f32[16,128]{1,0:T(8,128)}', space=vmem, size = 0x2000, scoped, tag = 'scratch operand']
  %s0 = inlined_call_operand.vmem [shape: bf16[16,16], index: 0, kind: input, shape index: {}]
  %s1 = inlined_call_operand.vmem [shape: f32[16,128], index: 1, kind: input, shape index: {}]
  %s2 = inlined_call_operand.vmem [shape: f32[16,128], index: 2, kind: output, shape index: {}]
  %s3 = sld [smem:[#allocation0]]
  $region26: #{net2_pallas.3} parent=0
    _
  %s5 = ssub.s32 1, %s3
  %s6 = scalar_select 0, %s5, %s3
  // Predicated region
  $region2: #{net2_pallas.3} parent=0 // pred_check
    _
  $region3: #{net2_pallas.3} parent=0 // pred_check_branch
    %8 = sbr.rel (0) target = $region5
  $region4: #{net2_pallas.3} parent=0 // pred_region
    _
  $region5: #{net2_pallas.3} parent=0 // pred_fallthru
    _
  // Predicated region
  $region6: #{net2_pallas.3} parent=0 // pred_check
    _
  $region7: #{net2_pallas.3} parent=0 // pred_check_branch
    %10 = sbr.rel (0) target = $region9
  $region8: #{net2_pallas.3} parent=0 // pred_region
    _
  $region9: #{net2_pallas.3} parent=0 // pred_fallthru
    _
  %p12 = scmp.eq.s32.totalorder 0, 0
  // Predicated region
  $region10: #{net2_pallas.3} parent=0 // pred_check
    %p13 = pneg %p12
  $region11: #{net2_pallas.3} parent=0 // pred_check_branch
    %15 = sbr.rel (%p13) target = $region13
  $region12: #{net2_pallas.3} parent=0 // pred_region
    %16 = vst [vmem:[#allocation2] sm:$0xff] 0.0
    %17 = vst [vmem:[#allocation2 + $0x8] sm:$0xff] 0.0
  $region13: #{net2_pallas.3} parent=0 // pred_fallthru
    _
  %v18 = vld [vmem:[#allocation2] sm:$0xff]
  %v19 = vld [vmem:[#allocation2 + $0x8] sm:$0xff]
  %v20 = vld [vmem:[%s0] sm:$0xf]
  %v21 = vld [vmem:[%s0 + $0x4] sm:$0xf]
  %v22 = vld [vmem:[%s1] sm:$0xff]
  %v23 = vld [vmem:[%s1 + $0x8] sm:$0xff]
  %v26 = vunpack.c.l.b16 %v20
  %v27 = vunpack.c.l.b16 %v21
  %v28 = vpack.c.b16 %v27, %v26
  %vm29 = vcmask 130048
  %v31 = vsel %vm29, %v28, 0
  %33 = vmatprep.subr.mxu0 0.0
  %34 = vmatpush1.msra.mxu0 %v22
  %35 = vmatprep.subr.mxu0 0.0
  %36 = vmatpush1.msra.mxu0 %v23
  %37 = vmatprep.subr.mxu0 0.0
  %38 = vmatpush1.msra.mxu0 0.0
  %39 = vmatprep.subr.mxu0 0.0
  %40 = vmatpush1.msra.mxu0 0.0
  %41 = vmatprep.subr.mxu0 0.0
  %42 = vmatpush1.msra.mxu0 0.0
  %43 = vmatprep.subr.mxu0 0.0
  %44 = vmatpush1.msra.mxu0 0.0
  %45 = vmatprep.subr.mxu0 0.0
  %46 = vmatpush1.msra.mxu0 0.0
  %47 = vmatprep.subr.mxu0 0.0
  %48 = vmatpush1.msra.mxu0 0.0
  %49 = vmatprep.subr.mxu0 0.0
  %50 = vmatpush1.msra.mxu0 0.0
  %51 = vmatprep.subr.mxu0 0.0
  %52 = vmatpush1.msra.mxu0 0.0
  %53 = vmatprep.subr.mxu0 0.0
  %54 = vmatpush1.msra.mxu0 0.0
  %55 = vmatprep.subr.mxu0 0.0
  %56 = vmatpush1.msra.mxu0 0.0
  %57 = vmatprep.subr.mxu0 0.0
  %58 = vmatpush1.msra.mxu0 0.0
  %59 = vmatprep.subr.mxu0 0.0
  %60 = vmatpush1.msra.mxu0 0.0
  %61 = vmatprep.subr.mxu0 0.0
  %62 = vmatpush1.msra.mxu0 0.0
  %63 = vmatprep.subr.mxu0 0.0
  %64 = vmatpush1.msra.mxu0 0.0
  %65 = vmatprep.subr.mxu0 0.0
  %66 = vmatpush1.msra.mxu0 0.0
  %67 = vmatprep.subr.mxu0 0.0
  %68 = vmatpush1.msra.mxu0 0.0
  %69 = vmatprep.subr.mxu0 0.0
  %70 = vmatpush1.msra.mxu0 0.0
  %71 = vmatprep.subr.mxu0 0.0
  %72 = vmatpush1.msra.mxu0 0.0
  %73 = vmatprep.subr.mxu0 0.0
  %74 = vmatpush1.msra.mxu0 0.0
  %75 = vmatprep.subr.mxu0 0.0
  %76 = vmatpush1.msra.mxu0 0.0
  %77 = vmatprep.subr.mxu0 0.0
  %78 = vmatpush1.msra.mxu0 0.0
  %79 = vmatprep.subr.mxu0 0.0
  %80 = vmatpush1.msra.mxu0 0.0
  %81 = vmatprep.subr.mxu0 0.0
  %82 = vmatpush1.msra.mxu0 0.0
  %83 = vmatprep.subr.mxu0 0.0
  %84 = vmatpush1.msra.mxu0 0.0
  %85 = vmatprep.subr.mxu0 0.0
  %86 = vmatpush1.msra.mxu0 0.0
  %87 = vmatprep.subr.mxu0 0.0
  %88 = vmatpush1.msra.mxu0 0.0
  %89 = vmatprep.subr.mxu0 0.0
  %90 = vmatpush1.msra.mxu0 0.0
  %91 = vmatprep.subr.mxu0 0.0
  %92 = vmatpush1.msra.mxu0 0.0
  %93 = vmatprep.subr.mxu0 0.0
  %94 = vmatpush1.msra.mxu0 0.0
  %95 = vmatprep.subr.mxu0 0.0
  %96 = vmatpush1.msra.mxu0 0.0
  %97 = vmatprep.mubr.bf16.mxu0 0
  %98 = vmatmul.mubr.bf16.gmra.mrb[0].mxu0 %v31
  %v99 = vpop.f32.mrb[0].mxu0
  %v100 = vadd.f32 0.0, %v99
  %v101 = vpop.f32.mrb[0].mxu0
  %v102 = vpop.f32.mrb[0].mxu0
  %v103 = vadd.f32 0.0, %v102
  %v104 = vpop.f32.mrb[0].mxu0
  %105 = vdwg.mxu0
  %v106 = vadd.f32 %v18, %v100
  %v107 = vadd.f32 %v19, %v103
  %108 = vst [vmem:[#allocation2] sm:$0xff] %v106
  %109 = vst [vmem:[#allocation2 + $0x8] sm:$0xff] %v107
  // Predicated region
  $region14: #{net2_pallas.3} parent=0 // pred_check
    %p110 = pneg %p12
  $region15: #{net2_pallas.3} parent=0 // pred_check_branch
    %112 = sbr.rel (%p110) target = $region17
  $region16: #{net2_pallas.3} parent=0 // pred_region
    %v113 = vld [vmem:[#allocation2] sm:$0xff]
    %v114 = vld [vmem:[#allocation2 + $0x8] sm:$0xff]
    %115 = vst [vmem:[%s2] sm:$0xff] %v113
    %116 = vst [vmem:[%s2 + $0x8] sm:$0xff] %v114
  $region17: #{net2_pallas.3} parent=0 // pred_fallthru
    _
  // Predicated region
  $region18: #{net2_pallas.3} parent=0 // pred_check
    _
  $region19: #{net2_pallas.3} parent=0 // pred_check_branch
    %118 = sbr.rel (0) target = $region21
  $region20: #{net2_pallas.3} parent=0 // pred_region
    _
  $region21: #{net2_pallas.3} parent=0 // pred_fallthru
    _
  // Predicated region
  $region22: #{net2_pallas.3} parent=0 // pred_check
    _
  $region23: #{net2_pallas.3} parent=0 // pred_check_branch
    %120 = sbr.rel (0) target = $region25
  $region24: #{net2_pallas.3} parent=0 // pred_region
    _
  $region25: #{net2_pallas.3} parent=0 // pred_fallthru
    _

// kernel: net2_pallas.2
$region0: #{net2_pallas.2}
  #allocation0 [shape = 'u32[]', space=smem, size = 0x4, offset = 0x4, fixed_abs, tag = 'smem constant byte address 0x4 - core index']
  #allocation1 [shape = 'u32[144,128]{1,0:T(1,128)}', space=vmem, size = 0x12000, scoped, tag = 'internal scratch']
  #allocation2 [shape = 'f32[16,128]{1,0:T(8,128)}', space=vmem, size = 0x2000, scoped, tag = 'scratch operand']
  %s0 = inlined_call_operand.vmem [shape: bf16[16,16], index: 0, kind: input, shape index: {}]
  %s1 = inlined_call_operand.vmem [shape: f32[16,8], index: 1, kind: input, shape index: {}]
  %s2 = inlined_call_operand.vmem [shape: f32[8,128], index: 2, kind: input, shape index: {}]
  %s3 = inlined_call_operand.vmem [shape: f32[128,128], index: 3, kind: input, shape index: {}]
  %s4 = inlined_call_operand.vmem [shape: f32[16,128], index: 4, kind: output, shape index: {}]
  %s5 = sld [smem:[#allocation0]]
  $region34: #{net2_pallas.2} parent=0
    _
  %s7 = ssub.s32 1, %s5
  %s8 = scalar_select 0, %s7, %s5
  // Predicated region
  $region2: #{net2_pallas.2} parent=0 // pred_check
    _
  $region3: #{net2_pallas.2} parent=0 // pred_check_branch
    %10 = sbr.rel (0) target = $region5
  $region4: #{net2_pallas.2} parent=0 // pred_region
    _
  $region5: #{net2_pallas.2} parent=0 // pred_fallthru
    _
  // Predicated region
  $region6: #{net2_pallas.2} parent=0 // pred_check
    _
  $region7: #{net2_pallas.2} parent=0 // pred_check_branch
    %12 = sbr.rel (0) target = $region9
  $region8: #{net2_pallas.2} parent=0 // pred_region
    _
  $region9: #{net2_pallas.2} parent=0 // pred_fallthru
    _
  // Predicated region
  $region10: #{net2_pallas.2} parent=0 // pred_check
    _
  $region11: #{net2_pallas.2} parent=0 // pred_check_branch
    %14 = sbr.rel (0) target = $region13
  $region12: #{net2_pallas.2} parent=0 // pred_region
    _
  $region13: #{net2_pallas.2} parent=0 // pred_fallthru
    _
  // Predicated region
  $region14: #{net2_pallas.2} parent=0 // pred_check
    _
  $region15: #{net2_pallas.2} parent=0 // pred_check_branch
    %16 = sbr.rel (0) target = $region17
  $region16: #{net2_pallas.2} parent=0 // pred_region
    _
  $region17: #{net2_pallas.2} parent=0 // pred_fallthru
    _
  %p18 = scmp.eq.s32.totalorder 0, 0
  // Predicated region
  $region18: #{net2_pallas.2} parent=0 // pred_check
    %p19 = pneg %p18
  $region19: #{net2_pallas.2} parent=0 // pred_check_branch
    %21 = sbr.rel (%p19) target = $region21
  $region20: #{net2_pallas.2} parent=0 // pred_region
    %22 = vst [vmem:[#allocation2] sm:$0xff] 0.0
    %23 = vst [vmem:[#allocation2 + $0x8] sm:$0xff] 0.0
  $region21: #{net2_pallas.2} parent=0 // pred_fallthru
    _
  %v24 = vld [vmem:[%s1] sm:$0xff]
  %v25 = vld [vmem:[%s1 + $0x8] sm:$0xff]
  %v26 = vld [vmem:[%s2] sm:$0xff]
  %vm27 = vcmask 64512
  %v29 = vsel %vm27, %v24, 0
  %v32 = vsel %vm27, %v25, 0
  %34 = vmatprep.subr.mxu0 0.0
  %35 = vmatpush1.msra.mxu0 %v26
  %36 = vmatprep.subr.mxu0 0.0
  %37 = vmatpush1.msra.mxu0 0.0
  %38 = vmatprep.subr.mxu0 0.0
  %39 = vmatpush1.msra.mxu0 0.0
  %40 = vmatprep.subr.mxu0 0.0
  %41 = vmatpush1.msra.mxu0 0.0
  %42 = vmatprep.subr.mxu0 0.0
  %43 = vmatpush1.msra.mxu0 0.0
  %44 = vmatprep.subr.mxu0 0.0
  %45 = vmatpush1.msra.mxu0 0.0
  %46 = vmatprep.subr.mxu0 0.0
  %47 = vmatpush1.msra.mxu0 0.0
  %48 = vmatprep.subr.mxu0 0.0
  %49 = vmatpush1.msra.mxu0 0.0
  %50 = vmatprep.subr.mxu0 0.0
  %51 = vmatpush1.msra.mxu0 0.0
  %52 = vmatprep.subr.mxu0 0.0
  %53 = vmatpush1.msra.mxu0 0.0
  %54 = vmatprep.subr.mxu0 0.0
  %55 = vmatpush1.msra.mxu0 0.0
  %56 = vmatprep.subr.mxu0 0.0
  %57 = vmatpush1.msra.mxu0 0.0
  %58 = vmatprep.subr.mxu0 0.0
  %59 = vmatpush1.msra.mxu0 0.0
  %60 = vmatprep.subr.mxu0 0.0
  %61 = vmatpush1.msra.mxu0 0.0
  %62 = vmatprep.subr.mxu0 0.0
  %63 = vmatpush1.msra.mxu0 0.0
  %64 = vmatprep.subr.mxu0 0.0
  %65 = vmatpush1.msra.mxu0 0.0
  %66 = vmatprep.subr.mxu0 0.0
  %67 = vmatpush1.msra.mxu0 0.0
  %68 = vmatprep.subr.mxu0 0.0
  %69 = vmatpush1.msra.mxu0 0.0
  %70 = vmatprep.subr.mxu0 0.0
  %71 = vmatpush1.msra.mxu0 0.0
  %72 = vmatprep.subr.mxu0 0.0
  %73 = vmatpush1.msra.mxu0 0.0
  %74 = vmatprep.subr.mxu0 0.0
  %75 = vmatpush1.msra.mxu0 0.0
  %76 = vmatprep.subr.mxu0 0.0
  %77 = vmatpush1.msra.mxu0 0.0
  %78 = vmatprep.subr.mxu0 0.0
  %79 = vmatpush1.msra.mxu0 0.0
  %80 = vmatprep.subr.mxu0 0.0
  %81 = vmatpush1.msra.mxu0 0.0
  %82 = vmatprep.subr.mxu0 0.0
  %83 = vmatpush1.msra.mxu0 0.0
  %84 = vmatprep.subr.mxu0 0.0
  %85 = vmatpush1.msra.mxu0 0.0
  %86 = vmatprep.subr.mxu0 0.0
  %87 = vmatpush1.msra.mxu0 0.0
  %88 = vmatprep.subr.mxu0 0.0
  %89 = vmatpush1.msra.mxu0 0.0
  %90 = vmatprep.subr.mxu0 0.0
  %91 = vmatpush1.msra.mxu0 0.0
  %92 = vmatprep.subr.mxu0 0.0
  %93 = vmatpush1.msra.mxu0 0.0
  %94 = vmatprep.subr.mxu0 0.0
  %95 = vmatpush1.msra.mxu0 0.0
  %96 = vmatprep.subr.mxu0 0.0
  %97 = vmatpush1.msra.mxu0 0.0
  %98 = vmatprep.mubr.f32.mxu0 0.0
  %99 = vmatmul.mubr.f32.gmra.mrb[0].mxu0 %v29
  %v100 = vpop.f32.mrb[0].mxu0
  %v101 = vadd.f32 0.0, %v100
  %v102 = vpop.f32.mrb[0].mxu0
  %103 = vmatprep.mubr.f32.mxu0 0.0
  %104 = vmatmul.mubr.f32.gmra.mrb[0].mxu0 %v32
  %v105 = vpop.f32.mrb[0].mxu0
  %v106 = vadd.f32 0.0, %v105
  %v107 = vpop.f32.mrb[0].mxu0
  %108 = vdwg.mxu0
  %v109 = vld [vmem:[#allocation2] sm:$0xff]
  %v110 = vld [vmem:[#allocation2 + $0x8] sm:$0xff]
  %v111 = vld [vmem:[%s0] sm:$0xf]
  %v112 = vld [vmem:[%s0 + $0x4] sm:$0xf]
  %v115 = vunpack.c.l.b16 %v111
  %v116 = vunpack.c.l.b16 %v112
  %v117 = vpack.c.b16 %v116, %v115
  %vm118 = vcmask 130048
  %v120 = vsel %vm118, %v117, 0
  %122 = vmatprep.subr.mxu0 0.0
  %123 = vmatpush1.msra.mxu0 %v101
  %124 = vmatprep.subr.mxu0 0.0
  %125 = vmatpush1.msra.mxu0 %v106
  %126 = vmatprep.subr.mxu0 0.0
  %127 = vmatpush1.msra.mxu0 0.0
  %128 = vmatprep.subr.mxu0 0.0
  %129 = vmatpush1.msra.mxu0 0.0
  %130 = vmatprep.subr.mxu0 0.0
  %131 = vmatpush1.msra.mxu0 0.0
  %132 = vmatprep.subr.mxu0 0.0
  %133 = vmatpush1.msra.mxu0 0.0
  %134 = vmatprep.subr.mxu0 0.0
  %135 = vmatpush1.msra.mxu0 0.0
  %136 = vmatprep.subr.mxu0 0.0
  %137 = vmatpush1.msra.mxu0 0.0
  %138 = vmatprep.subr.mxu0 0.0
  %139 = vmatpush1.msra.mxu0 0.0
  %140 = vmatprep.subr.mxu0 0.0
  %141 = vmatpush1.msra.mxu0 0.0
  %142 = vmatprep.subr.mxu0 0.0
  %143 = vmatpush1.msra.mxu0 0.0
  %144 = vmatprep.subr.mxu0 0.0
  %145 = vmatpush1.msra.mxu0 0.0
  %146 = vmatprep.subr.mxu0 0.0
  %147 = vmatpush1.msra.mxu0 0.0
  %148 = vmatprep.subr.mxu0 0.0
  %149 = vmatpush1.msra.mxu0 0.0
  %150 = vmatprep.subr.mxu0 0.0
  %151 = vmatpush1.msra.mxu0 0.0
  %152 = vmatprep.subr.mxu0 0.0
  %153 = vmatpush1.msra.mxu0 0.0
  %154 = vmatprep.subr.mxu0 0.0
  %155 = vmatpush1.msra.mxu0 0.0
  %156 = vmatprep.subr.mxu0 0.0
  %157 = vmatpush1.msra.mxu0 0.0
  %158 = vmatprep.subr.mxu0 0.0
  %159 = vmatpush1.msra.mxu0 0.0
  %160 = vmatprep.subr.mxu0 0.0
  %161 = vmatpush1.msra.mxu0 0.0
  %162 = vmatprep.subr.mxu0 0.0
  %163 = vmatpush1.msra.mxu0 0.0
  %164 = vmatprep.subr.mxu0 0.0
  %165 = vmatpush1.msra.mxu0 0.0
  %166 = vmatprep.subr.mxu0 0.0
  %167 = vmatpush1.msra.mxu0 0.0
  %168 = vmatprep.subr.mxu0 0.0
  %169 = vmatpush1.msra.mxu0 0.0
  %170 = vmatprep.subr.mxu0 0.0
  %171 = vmatpush1.msra.mxu0 0.0
  %172 = vmatprep.subr.mxu0 0.0
  %173 = vmatpush1.msra.mxu0 0.0
  %174 = vmatprep.subr.mxu0 0.0
  %175 = vmatpush1.msra.mxu0 0.0
  %176 = vmatprep.subr.mxu0 0.0
  %177 = vmatpush1.msra.mxu0 0.0
  %178 = vmatprep.subr.mxu0 0.0
  %179 = vmatpush1.msra.mxu0 0.0
  %180 = vmatprep.subr.mxu0 0.0
  %181 = vmatpush1.msra.mxu0 0.0
  %182 = vmatprep.subr.mxu0 0.0
  %183 = vmatpush1.msra.mxu0 0.0
  %184 = vmatprep.subr.mxu0 0.0
  %185 = vmatpush1.msra.mxu0 0.0
  %186 = vmatprep.mubr.bf16.mxu0 0
  %187 = vmatmul.mubr.bf16.gmra.mrb[0].mxu0 %v120
  %v188 = vpop.f32.mrb[0].mxu0
  %v189 = vadd.f32 0.0, %v188
  %v190 = vpop.f32.mrb[0].mxu0
  %v191 = vpop.f32.mrb[0].mxu0
  %v192 = vadd.f32 0.0, %v191
  %v193 = vpop.f32.mrb[0].mxu0
  %194 = vdwg.mxu0
  %v195 = vadd.f32 %v109, %v189
  %v196 = vadd.f32 %v110, %v192
  %197 = vst [vmem:[#allocation2] sm:$0xff] %v195
  %198 = vst [vmem:[#allocation2 + $0x8] sm:$0xff] %v196
  // Predicated region
  $region22: #{net2_pallas.2} parent=0 // pred_check
    %p199 = pneg %p18
  $region23: #{net2_pallas.2} parent=0 // pred_check_branch
    %201 = sbr.rel (%p199) target = $region25
  $region24: #{net2_pallas.2} parent=0 // pred_region
    %v202 = vld [vmem:[#allocation2] sm:$0xff]
    %v203 = vld [vmem:[#allocation2 + $0x8] sm:$0xff]
    %v204 = vmax.f32 %v202, 0.0
    %v205 = vmax.f32 %v203, 0.0
    %v206 = vld [vmem:[%s3] sm:$0xff]
    %v207 = vld [vmem:[%s3 + $0x8] sm:$0xff]
    %v208 = vld [vmem:[%s3 + $0x10] sm:$0xff]
    %v209 = vld [vmem:[%s3 + $0x18] sm:$0xff]
    %v210 = vld [vmem:[%s3 + $0x20] sm:$0xff]
    %v211 = vld [vmem:[%s3 + $0x28] sm:$0xff]
    %v212 = vld [vmem:[%s3 + $0x30] sm:$0xff]
    %v213 = vld [vmem:[%s3 + $0x38] sm:$0xff]
    %v214 = vld [vmem:[%s3 + $0x40] sm:$0xff]
    %v215 = vld [vmem:[%s3 + $0x48] sm:$0xff]
    %v216 = vld [vmem:[%s3 + $0x50] sm:$0xff]
    %v217 = vld [vmem:[%s3 + $0x58] sm:$0xff]
    %v218 = vld [vmem:[%s3 + $0x60] sm:$0xff]
    %v219 = vld [vmem:[%s3 + $0x68] sm:$0xff]
    %v220 = vld [vmem:[%s3 + $0x70] sm:$0xff]
    %v221 = vld [vmem:[%s3 + $0x78] sm:$0xff]
    %222 = vmatprep.subr.mxu0 0.0
    %223 = vmatpush1.msra.mxu0 %v206
    %224 = vmatprep.subr.mxu0 0.0
    %225 = vmatpush1.msra.mxu0 %v207
    %226 = vmatprep.subr.mxu0 0.0
    %227 = vmatpush1.msra.mxu0 %v208
    %228 = vmatprep.subr.mxu0 0.0
    %229 = vmatpush1.msra.mxu0 %v209
    %230 = vmatprep.subr.mxu0 0.0
    %231 = vmatpush1.msra.mxu0 %v210
    %232 = vmatprep.subr.mxu0 0.0
    %233 = vmatpush1.msra.mxu0 %v211
    %234 = vmatprep.subr.mxu0 0.0
    %235 = vmatpush1.msra.mxu0 %v212
    %236 = vmatprep.subr.mxu0 0.0
    %237 = vmatpush1.msra.mxu0 %v213
    %238 = vmatprep.subr.mxu0 0.0
    %239 = vmatpush1.msra.mxu0 %v214
    %240 = vmatprep.subr.mxu0 0.0
    %241 = vmatpush1.msra.mxu0 %v215
    %242 = vmatprep.subr.mxu0 0.0
    %243 = vmatpush1.msra.mxu0 %v216
    %244 = vmatprep.subr.mxu0 0.0
    %245 = vmatpush1.msra.mxu0 %v217
    %246 = vmatprep.subr.mxu0 0.0
    %247 = vmatpush1.msra.mxu0 %v218
    %248 = vmatprep.subr.mxu0 0.0
    %249 = vmatpush1.msra.mxu0 %v219
    %250 = vmatprep.subr.mxu0 0.0
    %251 = vmatpush1.msra.mxu0 %v220
    %252 = vmatprep.subr.mxu0 0.0
    %253 = vmatpush1.msra.mxu0 %v221
    %254 = vmatprep.subr.mxu0 0.0
    %255 = vmatpush1.msra.mxu0 0.0
    %256 = vmatprep.subr.mxu0 0.0
    %257 = vmatpush1.msra.mxu0 0.0
    %258 = vmatprep.subr.mxu0 0.0
    %259 = vmatpush1.msra.mxu0 0.0
    %260 = vmatprep.subr.mxu0 0.0
    %261 = vmatpush1.msra.mxu0 0.0
    %262 = vmatprep.subr.mxu0 0.0
    %263 = vmatpush1.msra.mxu0 0.0
    %264 = vmatprep.subr.mxu0 0.0
    %265 = vmatpush1.msra.mxu0 0.0
    %266 = vmatprep.subr.mxu0 0.0
    %267 = vmatpush1.msra.mxu0 0.0
    %268 = vmatprep.subr.mxu0 0.0
    %269 = vmatpush1.msra.mxu0 0.0
    %270 = vmatprep.subr.mxu0 0.0
    %271 = vmatpush1.msra.mxu0 0.0
    %272 = vmatprep.subr.mxu0 0.0
    %273 = vmatpush1.msra.mxu0 0.0
    %274 = vmatprep.subr.mxu0 0.0
    %275 = vmatpush1.msra.mxu0 0.0
    %276 = vmatprep.subr.mxu0 0.0
    %277 = vmatpush1.msra.mxu0 0.0
    %278 = vmatprep.subr.mxu0 0.0
    %279 = vmatpush1.msra.mxu0 0.0
    %280 = vmatprep.subr.mxu0 0.0
    %281 = vmatpush1.msra.mxu0 0.0
    %282 = vmatprep.subr.mxu0 0.0
    %283 = vmatpush1.msra.mxu0 0.0
    %284 = vmatprep.subr.mxu0 0.0
    %285 = vmatpush1.msra.mxu0 0.0
    %286 = vmatprep.mubr.f32.mxu0 0.0
    %287 = vmatmul.mubr.f32.gmra.mrb[0].mxu0 %v204
    %v288 = vpop.f32.mrb[0].mxu0
    %v289 = vadd.f32 0.0, %v288
    %v290 = vpop.f32.mrb[0].mxu0
    %291 = vmatprep.mubr.f32.mxu0 0.0
    %292 = vmatmul.mubr.f32.gmra.mrb[0].mxu0 %v205
    %v293 = vpop.f32.mrb[0].mxu0
    %v294 = vadd.f32 0.0, %v293
    %v295 = vpop.f32.mrb[0].mxu0
    %296 = vdwg.mxu0
    %297 = vst [vmem:[%s4] sm:$0xff] %v289
    %298 = vst [vmem:[%s4 + $0x8] sm:$0xff] %v294
  $region25: #{net2_pallas.2} parent=0 // pred_fallthru
    _
  // Predicated region
  $region26: #{net2_pallas.2} parent=0 // pred_check
    _
  $region27: #{net2_pallas.2} parent=0 // pred_check_branch
    %300 = sbr.rel (0) target = $region29
  $region28: #{net2_pallas.2} parent=0 // pred_region
    _
  $region29: #{net2_pallas.2} parent=0 // pred_fallthru
    _
  // Predicated region
  $region30: #{net2_pallas.2} parent=0 // pred_check
    _
  $region31: #{net2_pallas.2} parent=0 // pred_check_branch
    %302 = sbr.rel (0) target = $region33
  $region32: #{net2_pallas.2} parent=0 // pred_region
    _
  $region33: #{net2_pallas.2} parent=0 // pred_fallthru
    _

</llo_original>
